<compile_context>
chip_gen: v5e
topology: v5e:2x2
jax: 0.10.0
libtpu: 0.0.40
codegen_flags: <defaults>
</compile_context>

<pallas_src>
import functools

import jax
import jax.numpy as jnp
from jax.experimental import pallas as pl
from jax.experimental.pallas import tpu as pltpu


def _round_up(n, m):
    return ((n + m - 1) // m) * m


def _choose_tm(M, tm_target):
    """Row-tile chooser.

    - tiny M  (<=128): one dense step, rows rounded to the f32 sublane (8).
    - moderate M (<= tm_target): split into >=2 128-aligned steps so the
      'parallel' grid axis can shard across v7x's two TensorCores.
    - large M: pick the 128-aligned candidate (<= tm_target) that minimizes
      padded rows; ties go to the larger tile (fewer ~0.35us grid steps).
    """
    Mr = _round_up(M, 8)
    if Mr <= 128:
        return Mr
    if Mr <= tm_target:
        return max(128, _round_up(pl.cdiv(Mr, 2), 128))
    best_tm, best_pad = None, None
    for cand in (tm_target, 512, 256, 128):
        if cand > tm_target:
            continue
        pad = _round_up(M, cand) - M
        if best_pad is None or pad < best_pad:
            best_tm, best_pad = cand, pad
    return best_tm


def _vmem_cap_bytes():
    """~75% of physical VMEM (v7x: 64 MiB -> 48 MiB); safe fallback if the
    hardware query is unavailable."""
    try:
        return int(pltpu.get_tpu_info().vmem_capacity_bytes) * 3 // 4
    except Exception:
        return 48 << 20


def _fused_mlp_kernel(x_ref, w1_ref, b1_ref, wh_ref, bh_ref, out_ref):
    """One grid step: (tm, Dp) f32 row tile -> lane-dense (tm, Np) outputs."""
    # In-kernel bf16 cast of the streamed activations (VPU work hidden under
    # the MXU); weights are already bf16-resident.
    x = x_ref[...].astype(jnp.bfloat16)                          # (tm, Dp)
    # Hidden layer: feats @ W1 + b1, ReLU (bf16 MXU matmul, f32 accumulation;
    # bias/ReLU kept in f32 — v5e VPU has no native bf16 elementwise).
    h = jnp.dot(x, w1_ref[...], preferred_element_type=jnp.float32)
    h = jnp.maximum(h + b1_ref[...], 0.0)                        # (tm, Hp) f32
    h = h.astype(jnp.bfloat16)
    # Fused action|language head: single MXU push, single lane-dense store.
    o = jnp.dot(h, wh_ref[...], preferred_element_type=jnp.float32)
    out_ref[...] = (o + bh_ref[...]).astype(out_ref.dtype)       # (tm, Np)


def prepare_params(params):
    """One-time weight prep: lane-pad, fuse the two heads, cast to bf16.

    Hoisted out of the per-forward path so repeated inference does not pay an
    extra HBM round-trip of the weights on every call.
    """
    w1, b1 = params["w1"], params["b1"]
    wa, ba = params["wa"], params["ba"]
    wl, bl = params["wl"], params["bl"]
    D, h_size = w1.shape
    K, L = wa.shape[1], wl.shape[1]
    N = K + L
    Dp = _round_up(D, 128)
    Hp = _round_up(h_size, 128)
    Np = _round_up(N, 128)
    # Zero padding never affects the real output columns/rows.
    return {
        "w1p": jnp.pad(w1, ((0, Dp - D), (0, Hp - h_size))).astype(jnp.bfloat16),
        "b1p": jnp.pad(b1.reshape(1, h_size),
                       ((0, 0), (0, Hp - h_size))).astype(jnp.float32),
        "wh": jnp.pad(jnp.concatenate([wa, wl], axis=1),
                      ((0, Hp - h_size), (0, Np - N))).astype(jnp.bfloat16),
        "bh": jnp.pad(jnp.concatenate([ba.reshape(1, K), bl.reshape(1, L)], axis=1),
                      ((0, 0), (0, Np - N))).astype(jnp.float32),
    }


@functools.partial(jax.jit, static_argnames=("actn_size", "lang_size", "tm_target"))
def model_forward(x, prepped, *, actn_size, lang_size, tm_target=512):
    """x: (B, S, C, H, W) float -> (actn (B,S,K), lang (B,S,L))."""
    B, S, C, H, W = x.shape
    D = C * H * W
    M = B * S
    K, L = actn_size, lang_size

    w1p, b1p, wh, bh = prepped["w1p"], prepped["b1p"], prepped["wh"], prepped["bh"]
    Dp, Hp = w1p.shape
    Np = wh.shape[1]

    tm = _choose_tm(M, tm_target)
    Mp = _round_up(M, tm)
    grid = (Mp // tm,)

    # Stream activations in f32 (cast to bf16 inside the kernel). When D and M
    # are already aligned this is a pure reshape — no extra HBM pass at all.
    feats = x.reshape(M, D).astype(jnp.float32)
    if Mp != M or Dp != D:
        feats = jnp.pad(feats, ((0, Mp - M), (0, Dp - D)))

    # VMEM budget: streamed tiles double-buffered, resident Buffered(1)
    # weights counted once, plus compiler-scratch headroom; capped at ~75% of
    # physical VMEM so v7x (64 MiB/TC) keeps internal headroom.
    vmem_bytes = (2 * tm * Dp * 4            # feats row tiles (f32, 2 bufs)
                  + 2 * tm * Np * 4          # output tiles (f32, 2 bufs)
                  + Dp * Hp * 2              # W1 (bf16, single buffer)
                  + Hp * Np * 2              # fused head weight (bf16, single)
                  + Hp * 4 + Np * 4          # biases (f32, single)
                  + (2 << 20))               # headroom
    vmem_bytes = int(min(max(vmem_bytes, 4 << 20), _vmem_cap_bytes()))

    resident = dict(pipeline_mode=pl.Buffered(1))   # constant index_map blocks
    out_flat = pl.pallas_call(
        _fused_mlp_kernel,
        out_shape=jax.ShapeDtypeStruct((Mp, Np), jnp.float32),
        grid=grid,
        in_specs=[
            pl.BlockSpec((tm, Dp), lambda i: (i, 0)),             # feats (streamed)
            pl.BlockSpec((Dp, Hp), lambda i: (0, 0), **resident),  # W1
            pl.BlockSpec((1, Hp), lambda i: (0, 0), **resident),   # b1
            pl.BlockSpec((Hp, Np), lambda i: (0, 0), **resident),  # fused Wa|Wl
            pl.BlockSpec((1, Np), lambda i: (0, 0), **resident),   # fused ba|bl
        ],
        out_specs=pl.BlockSpec((tm, Np), lambda i: (i, 0)),
        compiler_params=pltpu.CompilerParams(
            dimension_semantics=("parallel",),
            vmem_limit_bytes=vmem_bytes,
        ),
    )(feats, w1p, b1p, wh, bh)

    actn = out_flat[:M, :K].reshape(B, S, K)
    lang = out_flat[:M, K:K + L].reshape(B, S, L)
    return actn, lang


def init_params(key, in_features, h_size, actn_size, lang_size):
    """Deterministic parameter init mimicking the module's layer shapes."""
    k1, k2, k3 = jax.random.split(key, 3)
    scale1 = 1.0 / jnp.sqrt(jnp.float32(in_features))
    scale2 = 1.0 / jnp.sqrt(jnp.float32(h_size))
    return {
        "w1": jax.random.normal(k1, (in_features, h_size), jnp.float32) * scale1,
        "b1": jnp.zeros((1, h_size), jnp.float32),
        "wa": jax.random.normal(k2, (h_size, actn_size), jnp.float32) * scale2,
        "ba": jnp.zeros((1, actn_size), jnp.float32),
        "wl": jax.random.normal(k3, (h_size, lang_size), jnp.float32) * scale2,
        "bl": jnp.zeros((1, lang_size), jnp.float32),
        # Unused-in-forward parameter kept for fidelity with the module.
        "_trn_whls": jnp.ones((1,), jnp.float32),
    }


if __name__ == "__main__":
    # Small shapes consistent with the documented forward: (B, S, C, H, W)
    B, S, C, H, W = 2, 8, 4, 16, 16
    actn_size, lang_size, h_size = 6, 10, 32

    key = jax.random.PRNGKey(0)
    kx, kp = jax.random.split(key)
    x = jax.random.normal(kx, (B, S, C, H, W), jnp.float32)
    params = init_params(kp, C * H * W, h_size, actn_size, lang_size)

    # One-time weight prep (hoisted out of the per-call path).
    prepped = prepare_params(params)

    actn, lang = model_forward(x, prepped, actn_size=actn_size,
                               lang_size=lang_size)
    jax.block_until_ready((actn, lang))

    # Cross-check against a plain-JAX reference of the same pipeline using the
    # same bf16 quantization of feats / weights (kernel accumulates in f32).
    feats = x.reshape(B * S, -1)
    f_bf = feats.astype(jnp.bfloat16).astype(jnp.float32)
    w1_bf = params["w1"].astype(jnp.bfloat16).astype(jnp.float32)
    wa_bf = params["wa"].astype(jnp.bfloat16).astype(jnp.float32)
    wl_bf = params["wl"].astype(jnp.bfloat16).astype(jnp.float32)
    h_ref = jnp.maximum(f_bf @ w1_bf + params["b1"], 0.0)
    h_bf = h_ref.astype(jnp.bfloat16).astype(jnp.float32)
    actn_ref = (h_bf @ wa_bf + params["ba"]).reshape(B, S, actn_size)
    lang_ref = (h_bf @ wl_bf + params["bl"]).reshape(B, S, lang_size)

    assert actn.shape == (B, S, actn_size) and lang.shape == (B, S, lang_size)
    assert jnp.allclose(actn, actn_ref, atol=5e-3, rtol=5e-3)
    assert jnp.allclose(lang, lang_ref, atol=5e-3, rtol=5e-3)

    print("KERNEL_OK")
</pallas_src>

<mosaic_0001>
module attributes {stable_mosaic.version = 11 : i64} {
  func.func @_fused_mlp_kernel(%arg0: i32, %arg1: memref<16x1024xf32, #tpu.memory_space<vmem>>, %arg2: memref<1024x128xbf16, #tpu.memory_space<vmem>>, %arg3: memref<1x128xf32, #tpu.memory_space<vmem>>, %arg4: memref<128x128xbf16, #tpu.memory_space<vmem>>, %arg5: memref<1x128xf32, #tpu.memory_space<vmem>>, %arg6: memref<16x128xf32, #tpu.memory_space<vmem>>) attributes {dimension_semantics = [#tpu.dimension_semantics<parallel>], iteration_bounds = array<i64: 1>, scalar_prefetch = 0 : i64, scratch_operands = 0 : i64, tpu.core_type = #tpu.core_type<tc>, window_params = [{transform_indices = @transform_0, window_bounds = array<i64: 16, 1024>}, {pipeline_mode = #tpu.pipeline_mode<synchronous>, transform_indices = @transform_1, window_bounds = array<i64: 1024, 128>}, {pipeline_mode = #tpu.pipeline_mode<synchronous>, transform_indices = @transform_2, window_bounds = array<i64: 1, 128>}, {pipeline_mode = #tpu.pipeline_mode<synchronous>, transform_indices = @transform_3, window_bounds = array<i64: 128, 128>}, {pipeline_mode = #tpu.pipeline_mode<synchronous>, transform_indices = @transform_4, window_bounds = array<i64: 1, 128>}, {transform_indices = @transform_5, window_bounds = array<i64: 16, 128>}]} {
    %c0 = arith.constant 0 : index
    %c0_0 = arith.constant 0 : index
    %0 = vector.load %arg1[%c0, %c0_0] : memref<16x1024xf32, #tpu.memory_space<vmem>>, vector<16x1024xf32>
    %1 = arith.truncf %0 : vector<16x1024xf32> to vector<16x1024xbf16>
    %c0_1 = arith.constant 0 : index
    %c0_2 = arith.constant 0 : index
    %2 = vector.load %arg2[%c0_1, %c0_2] : memref<1024x128xbf16, #tpu.memory_space<vmem>>, vector<1024x128xbf16>
    %cst = arith.constant dense<0.000000e+00> : vector<16x128xf32>
    %3 = tpu.matmul %1, %2, %cst {dimension_numbers = #tpu.dot_dimension_numbers<[1], [0], [0], [1], [0, 0, 1, 1], [], []>} : vector<16x1024xbf16>, vector<1024x128xbf16>, vector<16x128xf32> -> vector<16x128xf32>
    %c0_3 = arith.constant 0 : index
    %c0_4 = arith.constant 0 : index
    %4 = vector.load %arg3[%c0_3, %c0_4] : memref<1x128xf32, #tpu.memory_space<vmem>>, vector<1x128xf32>
    %5 = vector.broadcast %4 : vector<1x128xf32> to vector<16x128xf32>
    %6 = arith.addf %3, %5 : vector<16x128xf32>
    %cst_5 = arith.constant 0.000000e+00 : f32
    %7 = vector.broadcast %cst_5 : f32 to vector<16x128xf32>
    %8 = arith.maximumf %6, %7 : vector<16x128xf32>
    %9 = arith.truncf %8 : vector<16x128xf32> to vector<16x128xbf16>
    %c0_6 = arith.constant 0 : index
    %c0_7 = arith.constant 0 : index
    %10 = vector.load %arg4[%c0_6, %c0_7] : memref<128x128xbf16, #tpu.memory_space<vmem>>, vector<128x128xbf16>
    %cst_8 = arith.constant dense<0.000000e+00> : vector<16x128xf32>
    %11 = tpu.matmul %9, %10, %cst_8 {dimension_numbers = #tpu.dot_dimension_numbers<[1], [0], [0], [1], [0, 0, 1, 1], [], []>} : vector<16x128xbf16>, vector<128x128xbf16>, vector<16x128xf32> -> vector<16x128xf32>
    %c0_9 = arith.constant 0 : index
    %c0_10 = arith.constant 0 : index
    %12 = vector.load %arg5[%c0_9, %c0_10] : memref<1x128xf32, #tpu.memory_space<vmem>>, vector<1x128xf32>
    %13 = vector.broadcast %12 : vector<1x128xf32> to vector<16x128xf32>
    %14 = arith.addf %11, %13 : vector<16x128xf32>
    %c0_11 = arith.constant 0 : index
    %c0_12 = arith.constant 0 : index
    %15 = vector.load %arg6[%c0_11, %c0_12] : memref<16x128xf32, #tpu.memory_space<vmem>>, vector<16x128xf32>
    tpu.vector_store %arg6[%c0_11, %c0_12], %14 {strides = array<i32>} : memref<16x128xf32, #tpu.memory_space<vmem>>, vector<16x128xf32>,
    return
  }
  func.func @transform_0(%arg0: i32) -> (i32, i32) {
    %c0_i32 = arith.constant 0 : i32
    %c0_i32_0 = arith.constant 0 : i32
    return %arg0, %c0_i32 : i32, i32
  }
  func.func @transform_1(%arg0: i32) -> (i32, i32) {
    %c0_i32 = arith.constant 0 : i32
    %c0_i32_0 = arith.constant 0 : i32
    %c0_i32_1 = arith.constant 0 : i32
    return %c0_i32, %c0_i32_0 : i32, i32
  }
  func.func @transform_2(%arg0: i32) -> (i32, i32) {
    %c0_i32 = arith.constant 0 : i32
    %c0_i32_0 = arith.constant 0 : i32
    %c0_i32_1 = arith.constant 0 : i32
    return %c0_i32, %c0_i32_0 : i32, i32
  }
  func.func @transform_3(%arg0: i32) -> (i32, i32) {
    %c0_i32 = arith.constant 0 : i32
    %c0_i32_0 = arith.constant 0 : i32
    %c0_i32_1 = arith.constant 0 : i32
    return %c0_i32, %c0_i32_0 : i32, i32
  }
  func.func @transform_4(%arg0: i32) -> (i32, i32) {
    %c0_i32 = arith.constant 0 : i32
    %c0_i32_0 = arith.constant 0 : i32
    %c0_i32_1 = arith.constant 0 : i32
    return %c0_i32, %c0_i32_0 : i32, i32
  }
  func.func @transform_5(%arg0: i32) -> (i32, i32) {
    %c0_i32 = arith.constant 0 : i32
    %c0_i32_0 = arith.constant 0 : i32
    return %arg0, %c0_i32 : i32, i32
  }
}

</mosaic_0001>

<llo_original>
// kernel: model_forward.1
$region0: #{model_forward.1}
  #allocation0 [shape = 'u32[]', space=smem, size = 0x4, offset = 0x4, fixed_abs, tag = 'smem constant byte address 0x4 - core index']
  #allocation1 [shape = 'u32[72,128]{1,0:T(1,128)}', space=vmem, size = 0x9000, scoped, tag = 'internal scratch']
  %s0 = inlined_call_operand.vmem [shape: f32[16,1024], index: 0, kind: input, shape index: {}]
  %s1 = inlined_call_operand.vmem [shape: bf16[1024,128], index: 1, kind: input, shape index: {}]
  %s2 = inlined_call_operand.vmem [shape: f32[1,128], index: 2, kind: input, shape index: {}]
  %s3 = inlined_call_operand.vmem [shape: bf16[128,128], index: 3, kind: input, shape index: {}]
  %s4 = inlined_call_operand.vmem [shape: f32[1,128], index: 4, kind: input, shape index: {}]
  %s5 = inlined_call_operand.vmem [shape: f32[16,128], index: 5, kind: output, shape index: {}]
  %s6 = sld [smem:[#allocation0]]
  $region30: #{model_forward.1} parent=0
    _
  %s8 = ssub.s32 1, %s6
  %s9 = scalar_select 0, %s8, %s6
  // Predicated region
  $region2: #{model_forward.1} parent=0 // pred_check
    _
  $region3: #{model_forward.1} parent=0 // pred_check_branch
    %11 = sbr.rel (0) target = $region5
  $region4: #{model_forward.1} parent=0 // pred_region
    _
  $region5: #{model_forward.1} parent=0 // pred_fallthru
    _
  // Predicated region
  $region6: #{model_forward.1} parent=0 // pred_check
    _
  $region7: #{model_forward.1} parent=0 // pred_check_branch
    %13 = sbr.rel (0) target = $region9
  $region8: #{model_forward.1} parent=0 // pred_region
    _
  $region9: #{model_forward.1} parent=0 // pred_fallthru
    _
  // Predicated region
  $region10: #{model_forward.1} parent=0 // pred_check
    _
  $region11: #{model_forward.1} parent=0 // pred_check_branch
    %15 = sbr.rel (0) target = $region13
  $region12: #{model_forward.1} parent=0 // pred_region
    _
  $region13: #{model_forward.1} parent=0 // pred_fallthru
    _
  // Predicated region
  $region14: #{model_forward.1} parent=0 // pred_check
    _
  $region15: #{model_forward.1} parent=0 // pred_check_branch
    %17 = sbr.rel (0) target = $region17
  $region16: #{model_forward.1} parent=0 // pred_region
    _
  $region17: #{model_forward.1} parent=0 // pred_fallthru
    _
  // Predicated region
  $region18: #{model_forward.1} parent=0 // pred_check
    _
  $region19: #{model_forward.1} parent=0 // pred_check_branch
    %19 = sbr.rel (0) target = $region21
  $region20: #{model_forward.1} parent=0 // pred_region
    _
  $region21: #{model_forward.1} parent=0 // pred_fallthru
    _
  %v20 = vld [vmem:[%s0] sm:$0xff]
  %v21 = vld [vmem:[%s0 + $0x8] sm:$0xff]
  %v22 = vld [vmem:[%s0 + $0x10] sm:$0xff]
  %v23 = vld [vmem:[%s0 + $0x18] sm:$0xff]
  %v24 = vld [vmem:[%s0 + $0x20] sm:$0xff]
  %v25 = vld [vmem:[%s0 + $0x28] sm:$0xff]
  %v26 = vld [vmem:[%s0 + $0x30] sm:$0xff]
  %v27 = vld [vmem:[%s0 + $0x38] sm:$0xff]
  %v28 = vld [vmem:[%s0 + $0x40] sm:$0xff]
  %v29 = vld [vmem:[%s0 + $0x48] sm:$0xff]
  %v30 = vld [vmem:[%s0 + $0x50] sm:$0xff]
  %v31 = vld [vmem:[%s0 + $0x58] sm:$0xff]
  %v32 = vld [vmem:[%s0 + $0x60] sm:$0xff]
  %v33 = vld [vmem:[%s0 + $0x68] sm:$0xff]
  %v34 = vld [vmem:[%s0 + $0x70] sm:$0xff]
  %v35 = vld [vmem:[%s0 + $0x78] sm:$0xff]
  %v36 = vpack.c.bf16 %v28, %v20
  %v37 = vpack.c.bf16 %v29, %v21
  %v38 = vpack.c.bf16 %v30, %v22
  %v39 = vpack.c.bf16 %v31, %v23
  %v40 = vpack.c.bf16 %v32, %v24
  %v41 = vpack.c.bf16 %v33, %v25
  %v42 = vpack.c.bf16 %v34, %v26
  %v43 = vpack.c.bf16 %v35, %v27
  %v44 = vld [vmem:[%s1] sm:$0xf]
  %v45 = vld [vmem:[%s1 + $0x4] sm:$0xf]
  %v46 = vld [vmem:[%s1 + $0x8] sm:$0xf]
  %v47 = vld [vmem:[%s1 + $0xc] sm:$0xf]
  %v48 = vld [vmem:[%s1 + $0x10] sm:$0xf]
  %v49 = vld [vmem:[%s1 + $0x14] sm:$0xf]
  %v50 = vld [vmem:[%s1 + $0x18] sm:$0xf]
  %v51 = vld [vmem:[%s1 + $0x1c] sm:$0xf]
  %v52 = vld [vmem:[%s1 + $0x20] sm:$0xf]
  %v53 = vld [vmem:[%s1 + $0x24] sm:$0xf]
  %v54 = vld [vmem:[%s1 + $0x28] sm:$0xf]
  %v55 = vld [vmem:[%s1 + $0x2c] sm:$0xf]
  %v56 = vld [vmem:[%s1 + $0x30] sm:$0xf]
  %v57 = vld [vmem:[%s1 + $0x34] sm:$0xf]
  %v58 = vld [vmem:[%s1 + $0x38] sm:$0xf]
  %v59 = vld [vmem:[%s1 + $0x3c] sm:$0xf]
  %v60 = vld [vmem:[%s1 + $0x40] sm:$0xf]
  %v61 = vld [vmem:[%s1 + $0x44] sm:$0xf]
  %v62 = vld [vmem:[%s1 + $0x48] sm:$0xf]
  %v63 = vld [vmem:[%s1 + $0x4c] sm:$0xf]
  %v64 = vld [vmem:[%s1 + $0x50] sm:$0xf]
  %v65 = vld [vmem:[%s1 + $0x54] sm:$0xf]
  %v66 = vld [vmem:[%s1 + $0x58] sm:$0xf]
  %v67 = vld [vmem:[%s1 + $0x5c] sm:$0xf]
  %v68 = vld [vmem:[%s1 + $0x60] sm:$0xf]
  %v69 = vld [vmem:[%s1 + $0x64] sm:$0xf]
  %v70 = vld [vmem:[%s1 + $0x68] sm:$0xf]
  %v71 = vld [vmem:[%s1 + $0x6c] sm:$0xf]
  %v72 = vld [vmem:[%s1 + $0x70] sm:$0xf]
  %v73 = vld [vmem:[%s1 + $0x74] sm:$0xf]
  %v74 = vld [vmem:[%s1 + $0x78] sm:$0xf]
  %v75 = vld [vmem:[%s1 + $0x7c] sm:$0xf]
  %v76 = vld [vmem:[%s1 + $0x80] sm:$0xf]
  %v77 = vld [vmem:[%s1 + $0x84] sm:$0xf]
  %v78 = vld [vmem:[%s1 + $0x88] sm:$0xf]
  %v79 = vld [vmem:[%s1 + $0x8c] sm:$0xf]
  %v80 = vld [vmem:[%s1 + $0x90] sm:$0xf]
  %v81 = vld [vmem:[%s1 + $0x94] sm:$0xf]
  %v82 = vld [vmem:[%s1 + $0x98] sm:$0xf]
  %v83 = vld [vmem:[%s1 + $0x9c] sm:$0xf]
  %v84 = vld [vmem:[%s1 + $0xa0] sm:$0xf]
  %v85 = vld [vmem:[%s1 + $0xa4] sm:$0xf]
  %v86 = vld [vmem:[%s1 + $0xa8] sm:$0xf]
  %v87 = vld [vmem:[%s1 + $0xac] sm:$0xf]
  %v88 = vld [vmem:[%s1 + $0xb0] sm:$0xf]
  %v89 = vld [vmem:[%s1 + $0xb4] sm:$0xf]
  %v90 = vld [vmem:[%s1 + $0xb8] sm:$0xf]
  %v91 = vld [vmem:[%s1 + $0xbc] sm:$0xf]
  %v92 = vld [vmem:[%s1 + $0xc0] sm:$0xf]
  %v93 = vld [vmem:[%s1 + $0xc4] sm:$0xf]
  %v94 = vld [vmem:[%s1 + $0xc8] sm:$0xf]
  %v95 = vld [vmem:[%s1 + $0xcc] sm:$0xf]
  %v96 = vld [vmem:[%s1 + $0xd0] sm:$0xf]
  %v97 = vld [vmem:[%s1 + $0xd4] sm:$0xf]
  %v98 = vld [vmem:[%s1 + $0xd8] sm:$0xf]
  %v99 = vld [vmem:[%s1 + $0xdc] sm:$0xf]
  %v100 = vld [vmem:[%s1 + $0xe0] sm:$0xf]
  %v101 = vld [vmem:[%s1 + $0xe4] sm:$0xf]
  %v102 = vld [vmem:[%s1 + $0xe8] sm:$0xf]
  %v103 = vld [vmem:[%s1 + $0xec] sm:$0xf]
  %v104 = vld [vmem:[%s1 + $0xf0] sm:$0xf]
  %v105 = vld [vmem:[%s1 + $0xf4] sm:$0xf]
  %v106 = vld [vmem:[%s1 + $0xf8] sm:$0xf]
  %v107 = vld [vmem:[%s1 + $0xfc] sm:$0xf]
  %v108 = vld [vmem:[%s1 + $0x100] sm:$0xf]
  %v109 = vld [vmem:[%s1 + $0x104] sm:$0xf]
  %v110 = vld [vmem:[%s1 + $0x108] sm:$0xf]
  %v111 = vld [vmem:[%s1 + $0x10c] sm:$0xf]
  %v112 = vld [vmem:[%s1 + $0x110] sm:$0xf]
  %v113 = vld [vmem:[%s1 + $0x114] sm:$0xf]
  %v114 = vld [vmem:[%s1 + $0x118] sm:$0xf]
  %v115 = vld [vmem:[%s1 + $0x11c] sm:$0xf]
  %v116 = vld [vmem:[%s1 + $0x120] sm:$0xf]
  %v117 = vld [vmem:[%s1 + $0x124] sm:$0xf]
  %v118 = vld [vmem:[%s1 + $0x128] sm:$0xf]
  %v119 = vld [vmem:[%s1 + $0x12c] sm:$0xf]
  %v120 = vld [vmem:[%s1 + $0x130] sm:$0xf]
  %v121 = vld [vmem:[%s1 + $0x134] sm:$0xf]
  %v122 = vld [vmem:[%s1 + $0x138] sm:$0xf]
  %v123 = vld [vmem:[%s1 + $0x13c] sm:$0xf]
  %v124 = vld [vmem:[%s1 + $0x140] sm:$0xf]
  %v125 = vld [vmem:[%s1 + $0x144] sm:$0xf]
  %v126 = vld [vmem:[%s1 + $0x148] sm:$0xf]
  %v127 = vld [vmem:[%s1 + $0x14c] sm:$0xf]
  %v128 = vld [vmem:[%s1 + $0x150] sm:$0xf]
  %v129 = vld [vmem:[%s1 + $0x154] sm:$0xf]
  %v130 = vld [vmem:[%s1 + $0x158] sm:$0xf]
  %v131 = vld [vmem:[%s1 + $0x15c] sm:$0xf]
  %v132 = vld [vmem:[%s1 + $0x160] sm:$0xf]
  %v133 = vld [vmem:[%s1 + $0x164] sm:$0xf]
  %v134 = vld [vmem:[%s1 + $0x168] sm:$0xf]
  %v135 = vld [vmem:[%s1 + $0x16c] sm:$0xf]
  %v136 = vld [vmem:[%s1 + $0x170] sm:$0xf]
  %v137 = vld [vmem:[%s1 + $0x174] sm:$0xf]
  %v138 = vld [vmem:[%s1 + $0x178] sm:$0xf]
  %v139 = vld [vmem:[%s1 + $0x17c] sm:$0xf]
  %v140 = vld [vmem:[%s1 + $0x180] sm:$0xf]
  %v141 = vld [vmem:[%s1 + $0x184] sm:$0xf]
  %v142 = vld [vmem:[%s1 + $0x188] sm:$0xf]
  %v143 = vld [vmem:[%s1 + $0x18c] sm:$0xf]
  %v144 = vld [vmem:[%s1 + $0x190] sm:$0xf]
  %v145 = vld [vmem:[%s1 + $0x194] sm:$0xf]
  %v146 = vld [vmem:[%s1 + $0x198] sm:$0xf]
  %v147 = vld [vmem:[%s1 + $0x19c] sm:$0xf]
  %v148 = vld [vmem:[%s1 + $0x1a0] sm:$0xf]
  %v149 = vld [vmem:[%s1 + $0x1a4] sm:$0xf]
  %v150 = vld [vmem:[%s1 + $0x1a8] sm:$0xf]
  %v151 = vld [vmem:[%s1 + $0x1ac] sm:$0xf]
  %v152 = vld [vmem:[%s1 + $0x1b0] sm:$0xf]
  %v153 = vld [vmem:[%s1 + $0x1b4] sm:$0xf]
  %v154 = vld [vmem:[%s1 + $0x1b8] sm:$0xf]
  %v155 = vld [vmem:[%s1 + $0x1bc] sm:$0xf]
  %v156 = vld [vmem:[%s1 + $0x1c0] sm:$0xf]
  %v157 = vld [vmem:[%s1 + $0x1c4] sm:$0xf]
  %v158 = vld [vmem:[%s1 + $0x1c8] sm:$0xf]
  %v159 = vld [vmem:[%s1 + $0x1cc] sm:$0xf]
  %v160 = vld [vmem:[%s1 + $0x1d0] sm:$0xf]
  %v161 = vld [vmem:[%s1 + $0x1d4] sm:$0xf]
  %v162 = vld [vmem:[%s1 + $0x1d8] sm:$0xf]
  %v163 = vld [vmem:[%s1 + $0x1dc] sm:$0xf]
  %v164 = vld [vmem:[%s1 + $0x1e0] sm:$0xf]
  %v165 = vld [vmem:[%s1 + $0x1e4] sm:$0xf]
  %v166 = vld [vmem:[%s1 + $0x1e8] sm:$0xf]
  %v167 = vld [vmem:[%s1 + $0x1ec] sm:$0xf]
  %v168 = vld [vmem:[%s1 + $0x1f0] sm:$0xf]
  %v169 = vld [vmem:[%s1 + $0x1f4] sm:$0xf]
  %v170 = vld [vmem:[%s1 + $0x1f8] sm:$0xf]
  %v171 = vld [vmem:[%s1 + $0x1fc] sm:$0xf]
  %v172 = vld [vmem:[%s2] sm:$0x1]
  %v174 = vperm.slane %v172, 0
  %v304 = vunpack.c.l.b16 %v44
  %v305 = vunpack.c.l.b16 %v45
  %v306 = vunpack.c.l.b16 %v46
  %v307 = vunpack.c.l.b16 %v47
  %v308 = vunpack.c.l.b16 %v48
  %v309 = vunpack.c.l.b16 %v49
  %v310 = vunpack.c.l.b16 %v50
  %v311 = vunpack.c.l.b16 %v51
  %v312 = vunpack.c.l.b16 %v52
  %v313 = vunpack.c.l.b16 %v53
  %v314 = vunpack.c.l.b16 %v54
  %v315 = vunpack.c.l.b16 %v55
  %v316 = vunpack.c.l.b16 %v56
  %v317 = vunpack.c.l.b16 %v57
  %v318 = vunpack.c.l.b16 %v58
  %v319 = vunpack.c.l.b16 %v59
  %v320 = vunpack.c.l.b16 %v60
  %v321 = vunpack.c.l.b16 %v61
  %v322 = vunpack.c.l.b16 %v62
  %v323 = vunpack.c.l.b16 %v63
  %v324 = vunpack.c.l.b16 %v64
  %v325 = vunpack.c.l.b16 %v65
  %v326 = vunpack.c.l.b16 %v66
  %v327 = vunpack.c.l.b16 %v67
  %v328 = vunpack.c.l.b16 %v68
  %v329 = vunpack.c.l.b16 %v69
  %v330 = vunpack.c.l.b16 %v70
  %v331 = vunpack.c.l.b16 %v71
  %v332 = vunpack.c.l.b16 %v72
  %v333 = vunpack.c.l.b16 %v73
  %v334 = vunpack.c.l.b16 %v74
  %v335 = vunpack.c.l.b16 %v75
  %v336 = vunpack.c.l.b16 %v76
  %v337 = vunpack.c.l.b16 %v77
  %v338 = vunpack.c.l.b16 %v78
  %v339 = vunpack.c.l.b16 %v79
  %v340 = vunpack.c.l.b16 %v80
  %v341 = vunpack.c.l.b16 %v81
  %v342 = vunpack.c.l.b16 %v82
  %v343 = vunpack.c.l.b16 %v83
  %v344 = vunpack.c.l.b16 %v84
  %v345 = vunpack.c.l.b16 %v85
  %v346 = vunpack.c.l.b16 %v86
  %v347 = vunpack.c.l.b16 %v87
  %v348 = vunpack.c.l.b16 %v88
  %v349 = vunpack.c.l.b16 %v89
  %v350 = vunpack.c.l.b16 %v90
  %v351 = vunpack.c.l.b16 %v91
  %v352 = vunpack.c.l.b16 %v92
  %v353 = vunpack.c.l.b16 %v93
  %v354 = vunpack.c.l.b16 %v94
  %v355 = vunpack.c.l.b16 %v95
  %v356 = vunpack.c.l.b16 %v96
  %v357 = vunpack.c.l.b16 %v97
  %v358 = vunpack.c.l.b16 %v98
  %v359 = vunpack.c.l.b16 %v99
  %v360 = vunpack.c.l.b16 %v100
  %v361 = vunpack.c.l.b16 %v101
  %v362 = vunpack.c.l.b16 %v102
  %v363 = vunpack.c.l.b16 %v103
  %v364 = vunpack.c.l.b16 %v104
  %v365 = vunpack.c.l.b16 %v105
  %v366 = vunpack.c.l.b16 %v106
  %v367 = vunpack.c.l.b16 %v107
  %v368 = vunpack.c.l.b16 %v108
  %v369 = vunpack.c.l.b16 %v109
  %v370 = vunpack.c.l.b16 %v110
  %v371 = vunpack.c.l.b16 %v111
  %v372 = vunpack.c.l.b16 %v112
  %v373 = vunpack.c.l.b16 %v113
  %v374 = vunpack.c.l.b16 %v114
  %v375 = vunpack.c.l.b16 %v115
  %v376 = vunpack.c.l.b16 %v116
  %v377 = vunpack.c.l.b16 %v117
  %v378 = vunpack.c.l.b16 %v118
  %v379 = vunpack.c.l.b16 %v119
  %v380 = vunpack.c.l.b16 %v120
  %v381 = vunpack.c.l.b16 %v121
  %v382 = vunpack.c.l.b16 %v122
  %v383 = vunpack.c.l.b16 %v123
  %v384 = vunpack.c.l.b16 %v124
  %v385 = vunpack.c.l.b16 %v125
  %v386 = vunpack.c.l.b16 %v126
  %v387 = vunpack.c.l.b16 %v127
  %v388 = vunpack.c.l.b16 %v128
  %v389 = vunpack.c.l.b16 %v129
  %v390 = vunpack.c.l.b16 %v130
  %v391 = vunpack.c.l.b16 %v131
  %v392 = vunpack.c.l.b16 %v132
  %v393 = vunpack.c.l.b16 %v133
  %v394 = vunpack.c.l.b16 %v134
  %v395 = vunpack.c.l.b16 %v135
  %v396 = vunpack.c.l.b16 %v136
  %v397 = vunpack.c.l.b16 %v137
  %v398 = vunpack.c.l.b16 %v138
  %v399 = vunpack.c.l.b16 %v139
  %v400 = vunpack.c.l.b16 %v140
  %v401 = vunpack.c.l.b16 %v141
  %v402 = vunpack.c.l.b16 %v142
  %v403 = vunpack.c.l.b16 %v143
  %v404 = vunpack.c.l.b16 %v144
  %v405 = vunpack.c.l.b16 %v145
  %v406 = vunpack.c.l.b16 %v146
  %v407 = vunpack.c.l.b16 %v147
  %v408 = vunpack.c.l.b16 %v148
  %v409 = vunpack.c.l.b16 %v149
  %v410 = vunpack.c.l.b16 %v150
  %v411 = vunpack.c.l.b16 %v151
  %v412 = vunpack.c.l.b16 %v152
  %v413 = vunpack.c.l.b16 %v153
  %v414 = vunpack.c.l.b16 %v154
  %v415 = vunpack.c.l.b16 %v155
  %v416 = vunpack.c.l.b16 %v156
  %v417 = vunpack.c.l.b16 %v157
  %v418 = vunpack.c.l.b16 %v158
  %v419 = vunpack.c.l.b16 %v159
  %v420 = vunpack.c.l.b16 %v160
  %v421 = vunpack.c.l.b16 %v161
  %v422 = vunpack.c.l.b16 %v162
  %v423 = vunpack.c.l.b16 %v163
  %v424 = vunpack.c.l.b16 %v164
  %v425 = vunpack.c.l.b16 %v165
  %v426 = vunpack.c.l.b16 %v166
  %v427 = vunpack.c.l.b16 %v167
  %v428 = vunpack.c.l.b16 %v168
  %v429 = vunpack.c.l.b16 %v169
  %v430 = vunpack.c.l.b16 %v170
  %v431 = vunpack.c.l.b16 %v171
  %v432 = vpack.c.b16 %v305, %v304
  %v433 = vpack.c.b16 %v307, %v306
  %v434 = vpack.c.b16 %v309, %v308
  %v435 = vpack.c.b16 %v311, %v310
  %v436 = vpack.c.b16 %v313, %v312
  %v437 = vpack.c.b16 %v315, %v314
  %v438 = vpack.c.b16 %v317, %v316
  %v439 = vpack.c.b16 %v319, %v318
  %v440 = vpack.c.b16 %v321, %v320
  %v441 = vpack.c.b16 %v323, %v322
  %v442 = vpack.c.b16 %v325, %v324
  %v443 = vpack.c.b16 %v327, %v326
  %v444 = vpack.c.b16 %v329, %v328
  %v445 = vpack.c.b16 %v331, %v330
  %v446 = vpack.c.b16 %v333, %v332
  %v447 = vpack.c.b16 %v335, %v334
  %v448 = vpack.c.b16 %v337, %v336
  %v449 = vpack.c.b16 %v339, %v338
  %v450 = vpack.c.b16 %v341, %v340
  %v451 = vpack.c.b16 %v343, %v342
  %v452 = vpack.c.b16 %v345, %v344
  %v453 = vpack.c.b16 %v347, %v346
  %v454 = vpack.c.b16 %v349, %v348
  %v455 = vpack.c.b16 %v351, %v350
  %v456 = vpack.c.b16 %v353, %v352
  %v457 = vpack.c.b16 %v355, %v354
  %v458 = vpack.c.b16 %v357, %v356
  %v459 = vpack.c.b16 %v359, %v358
  %v460 = vpack.c.b16 %v361, %v360
  %v461 = vpack.c.b16 %v363, %v362
  %v462 = vpack.c.b16 %v365, %v364
  %v463 = vpack.c.b16 %v367, %v366
  %v464 = vpack.c.b16 %v369, %v368
  %v465 = vpack.c.b16 %v371, %v370
  %v466 = vpack.c.b16 %v373, %v372
  %v467 = vpack.c.b16 %v375, %v374
  %v468 = vpack.c.b16 %v377, %v376
  %v469 = vpack.c.b16 %v379, %v378
  %v470 = vpack.c.b16 %v381, %v380
  %v471 = vpack.c.b16 %v383, %v382
  %v472 = vpack.c.b16 %v385, %v384
  %v473 = vpack.c.b16 %v387, %v386
  %v474 = vpack.c.b16 %v389, %v388
  %v475 = vpack.c.b16 %v391, %v390
  %v476 = vpack.c.b16 %v393, %v392
  %v477 = vpack.c.b16 %v395, %v394
  %v478 = vpack.c.b16 %v397, %v396
  %v479 = vpack.c.b16 %v399, %v398
  %v480 = vpack.c.b16 %v401, %v400
  %v481 = vpack.c.b16 %v403, %v402
  %v482 = vpack.c.b16 %v405, %v404
  %v483 = vpack.c.b16 %v407, %v406
  %v484 = vpack.c.b16 %v409, %v408
  %v485 = vpack.c.b16 %v411, %v410
  %v486 = vpack.c.b16 %v413, %v412
  %v487 = vpack.c.b16 %v415, %v414
  %v488 = vpack.c.b16 %v417, %v416
  %v489 = vpack.c.b16 %v419, %v418
  %v490 = vpack.c.b16 %v421, %v420
  %v491 = vpack.c.b16 %v423, %v422
  %v492 = vpack.c.b16 %v425, %v424
  %v493 = vpack.c.b16 %v427, %v426
  %v494 = vpack.c.b16 %v429, %v428
  %v495 = vpack.c.b16 %v431, %v430
  %560 = vmatpush.bf16.msra.mxu0 %v439
  %561 = vmatpush.bf16.msra.mxu0 %v438
  %562 = vmatpush.bf16.msra.mxu0 %v437
  %563 = vmatpush.bf16.msra.mxu0 %v436
  %564 = vmatpush.bf16.msra.mxu0 %v435
  %565 = vmatpush.bf16.msra.mxu0 %v434
  %566 = vmatpush.bf16.msra.mxu0 %v433
  %567 = vmatpush.bf16.msra.mxu0 %v432
  %568 = vmatmul.bf16.gmra.mxu0 %v36
  %v569 = vpop.f32.mrf.mxu0
  %v570 = vadd.f32 %v174, %v569
  %v571 = vpop.f32.mrf.mxu0
  %v572 = vadd.f32 %v174, %v571
  %573 = vdwg.mxu0
  %574 = vmatpush.bf16.msra.mxu0 %v447
  %575 = vmatpush.bf16.msra.mxu0 %v446
  %576 = vmatpush.bf16.msra.mxu0 %v445
  %577 = vmatpush.bf16.msra.mxu0 %v444
  %578 = vmatpush.bf16.msra.mxu0 %v443
  %579 = vmatpush.bf16.msra.mxu0 %v442
  %580 = vmatpush.bf16.msra.mxu0 %v441
  %581 = vmatpush.bf16.msra.mxu0 %v440
  %582 = vmatmul.bf16.gmra.mxu0 %v37
  %v583 = vpop.f32.mrf.mxu0
  %v584 = vadd.f32 %v570, %v583
  %v585 = vpop.f32.mrf.mxu0
  %v586 = vadd.f32 %v572, %v585
  %587 = vdwg.mxu0
  %588 = vmatpush.bf16.msra.mxu0 %v455
  %589 = vmatpush.bf16.msra.mxu0 %v454
  %590 = vmatpush.bf16.msra.mxu0 %v453
  %591 = vmatpush.bf16.msra.mxu0 %v452
  %592 = vmatpush.bf16.msra.mxu0 %v451
  %593 = vmatpush.bf16.msra.mxu0 %v450
  %594 = vmatpush.bf16.msra.mxu0 %v449
  %595 = vmatpush.bf16.msra.mxu0 %v448
  %596 = vmatmul.bf16.gmra.mxu0 %v38
  %v597 = vpop.f32.mrf.mxu0
  %v598 = vadd.f32 %v584, %v597
  %v599 = vpop.f32.mrf.mxu0
  %v600 = vadd.f32 %v586, %v599
  %601 = vdwg.mxu0
  %602 = vmatpush.bf16.msra.mxu0 %v463
  %603 = vmatpush.bf16.msra.mxu0 %v462
  %604 = vmatpush.bf16.msra.mxu0 %v461
  %605 = vmatpush.bf16.msra.mxu0 %v460
  %606 = vmatpush.bf16.msra.mxu0 %v459
  %607 = vmatpush.bf16.msra.mxu0 %v458
  %608 = vmatpush.bf16.msra.mxu0 %v457
  %609 = vmatpush.bf16.msra.mxu0 %v456
  %610 = vmatmul.bf16.gmra.mxu0 %v39
  %v611 = vpop.f32.mrf.mxu0
  %v612 = vadd.f32 %v598, %v611
  %v613 = vpop.f32.mrf.mxu0
  %v614 = vadd.f32 %v600, %v613
  %615 = vdwg.mxu0
  %616 = vmatpush.bf16.msra.mxu0 %v471
  %617 = vmatpush.bf16.msra.mxu0 %v470
  %618 = vmatpush.bf16.msra.mxu0 %v469
  %619 = vmatpush.bf16.msra.mxu0 %v468
  %620 = vmatpush.bf16.msra.mxu0 %v467
  %621 = vmatpush.bf16.msra.mxu0 %v466
  %622 = vmatpush.bf16.msra.mxu0 %v465
  %623 = vmatpush.bf16.msra.mxu0 %v464
  %624 = vmatmul.bf16.gmra.mxu0 %v40
  %v625 = vpop.f32.mrf.mxu0
  %v626 = vadd.f32 %v612, %v625
  %v627 = vpop.f32.mrf.mxu0
  %v628 = vadd.f32 %v614, %v627
  %629 = vdwg.mxu0
  %630 = vmatpush.bf16.msra.mxu0 %v479
  %631 = vmatpush.bf16.msra.mxu0 %v478
  %632 = vmatpush.bf16.msra.mxu0 %v477
  %633 = vmatpush.bf16.msra.mxu0 %v476
  %634 = vmatpush.bf16.msra.mxu0 %v475
  %635 = vmatpush.bf16.msra.mxu0 %v474
  %636 = vmatpush.bf16.msra.mxu0 %v473
  %637 = vmatpush.bf16.msra.mxu0 %v472
  %638 = vmatmul.bf16.gmra.mxu0 %v41
  %v639 = vpop.f32.mrf.mxu0
  %v640 = vadd.f32 %v626, %v639
  %v641 = vpop.f32.mrf.mxu0
  %v642 = vadd.f32 %v628, %v641
  %643 = vdwg.mxu0
  %644 = vmatpush.bf16.msra.mxu0 %v487
  %645 = vmatpush.bf16.msra.mxu0 %v486
  %646 = vmatpush.bf16.msra.mxu0 %v485
  %647 = vmatpush.bf16.msra.mxu0 %v484
  %648 = vmatpush.bf16.msra.mxu0 %v483
  %649 = vmatpush.bf16.msra.mxu0 %v482
  %650 = vmatpush.bf16.msra.mxu0 %v481
  %651 = vmatpush.bf16.msra.mxu0 %v480
  %652 = vmatmul.bf16.gmra.mxu0 %v42
  %v653 = vpop.f32.mrf.mxu0
  %v654 = vadd.f32 %v640, %v653
  %v655 = vpop.f32.mrf.mxu0
  %v656 = vadd.f32 %v642, %v655
  %657 = vdwg.mxu0
  %658 = vmatpush.bf16.msra.mxu0 %v495
  %659 = vmatpush.bf16.msra.mxu0 %v494
  %660 = vmatpush.bf16.msra.mxu0 %v493
  %661 = vmatpush.bf16.msra.mxu0 %v492
  %662 = vmatpush.bf16.msra.mxu0 %v491
  %663 = vmatpush.bf16.msra.mxu0 %v490
  %664 = vmatpush.bf16.msra.mxu0 %v489
  %665 = vmatpush.bf16.msra.mxu0 %v488
  %666 = vmatmul.bf16.gmra.mxu0 %v43
  %v667 = vpop.f32.mrf.mxu0
  %v668 = vadd.f32 %v654, %v667
  %v669 = vpop.f32.mrf.mxu0
  %v670 = vadd.f32 %v656, %v669
  %671 = vdwg.mxu0
  %v672 = vmax.f32 %v668, 0.0
  %v673 = vmax.f32 %v670, 0.0
  %v674 = vpack.c.bf16 %v673, %v672
  %v675 = vld [vmem:[%s3] sm:$0xf]
  %v676 = vld [vmem:[%s3 + $0x4] sm:$0xf]
  %v677 = vld [vmem:[%s3 + $0x8] sm:$0xf]
  %v678 = vld [vmem:[%s3 + $0xc] sm:$0xf]
  %v679 = vld [vmem:[%s3 + $0x10] sm:$0xf]
  %v680 = vld [vmem:[%s3 + $0x14] sm:$0xf]
  %v681 = vld [vmem:[%s3 + $0x18] sm:$0xf]
  %v682 = vld [vmem:[%s3 + $0x1c] sm:$0xf]
  %v683 = vld [vmem:[%s3 + $0x20] sm:$0xf]
  %v684 = vld [vmem:[%s3 + $0x24] sm:$0xf]
  %v685 = vld [vmem:[%s3 + $0x28] sm:$0xf]
  %v686 = vld [vmem:[%s3 + $0x2c] sm:$0xf]
  %v687 = vld [vmem:[%s3 + $0x30] sm:$0xf]
  %v688 = vld [vmem:[%s3 + $0x34] sm:$0xf]
  %v689 = vld [vmem:[%s3 + $0x38] sm:$0xf]
  %v690 = vld [vmem:[%s3 + $0x3c] sm:$0xf]
  %v691 = vld [vmem:[%s4] sm:$0x1]
  %v693 = vperm.slane %v691, 0
  %v711 = vunpack.c.l.b16 %v675
  %v712 = vunpack.c.l.b16 %v676
  %v713 = vunpack.c.l.b16 %v677
  %v714 = vunpack.c.l.b16 %v678
  %v715 = vunpack.c.l.b16 %v679
  %v716 = vunpack.c.l.b16 %v680
  %v717 = vunpack.c.l.b16 %v681
  %v718 = vunpack.c.l.b16 %v682
  %v719 = vunpack.c.l.b16 %v683
  %v720 = vunpack.c.l.b16 %v684
  %v721 = vunpack.c.l.b16 %v685
  %v722 = vunpack.c.l.b16 %v686
  %v723 = vunpack.c.l.b16 %v687
  %v724 = vunpack.c.l.b16 %v688
  %v725 = vunpack.c.l.b16 %v689
  %v726 = vunpack.c.l.b16 %v690
  %v727 = vpack.c.b16 %v712, %v711
  %v728 = vpack.c.b16 %v714, %v713
  %v729 = vpack.c.b16 %v716, %v715
  %v730 = vpack.c.b16 %v718, %v717
  %v731 = vpack.c.b16 %v720, %v719
  %v732 = vpack.c.b16 %v722, %v721
  %v733 = vpack.c.b16 %v724, %v723
  %v734 = vpack.c.b16 %v726, %v725
  %743 = vmatpush.bf16.msra.mxu0 %v734
  %744 = vmatpush.bf16.msra.mxu0 %v733
  %745 = vmatpush.bf16.msra.mxu0 %v732
  %746 = vmatpush.bf16.msra.mxu0 %v731
  %747 = vmatpush.bf16.msra.mxu0 %v730
  %748 = vmatpush.bf16.msra.mxu0 %v729
  %749 = vmatpush.bf16.msra.mxu0 %v728
  %750 = vmatpush.bf16.msra.mxu0 %v727
  %751 = vmatmul.bf16.gmra.mxu0 %v674
  %v752 = vpop.f32.mrf.mxu0
  %v753 = vadd.f32 %v693, %v752
  %v754 = vpop.f32.mrf.mxu0
  %v755 = vadd.f32 %v693, %v754
  %756 = vdwg.mxu0
  %757 = vst [vmem:[%s5] sm:$0xff] %v753
  %758 = vst [vmem:[%s5 + $0x8] sm:$0xff] %v755
  // Predicated region
  $region22: #{model_forward.1} parent=0 // pred_check
    _
  $region23: #{model_forward.1} parent=0 // pred_check_branch
    %760 = sbr.rel (0) target = $region25
  $region24: #{model_forward.1} parent=0 // pred_region
    _
  $region25: #{model_forward.1} parent=0 // pred_fallthru
    _
  // Predicated region
  $region26: #{model_forward.1} parent=0 // pred_check
    _
  $region27: #{model_forward.1} parent=0 // pred_check_branch
    %762 = sbr.rel (0) target = $region29
  $region28: #{model_forward.1} parent=0 // pred_region
    _
  $region29: #{model_forward.1} parent=0 // pred_fallthru
    _

</llo_original>
